<compile_context>
chip_gen: v6e
topology: v6e:2x2x1
jax: 0.10.0
libtpu: 0.0.40
codegen_flags: <defaults>
</compile_context>

<pallas_src>
import functools

import jax
import jax.numpy as jnp
from jax.experimental import pallas as pl
from jax.experimental.pallas import tpu as pltpu


# ---------------------------------------------------------------------------
# Kernels
# ---------------------------------------------------------------------------

def _ce_nll_single_kernel(logits_ref, target_ref, nll_ref):
    """Fast path: the whole class dimension fits in one block.

    logits_ref: (TN, C) native dtype   target_ref: (TN, 1) int32
    nll_ref:    (TN, 1) float32
    """
    x_nat = logits_ref[...]
    x = x_nat.astype(jnp.float32)
    tn, c = x.shape
    ids = jax.lax.broadcasted_iota(jnp.int32, (tn, c), 1)

    m = jnp.max(x_nat, axis=-1, keepdims=True).astype(jnp.float32)
    lse = m + jnp.log(jnp.sum(jnp.exp(x - m), axis=-1, keepdims=True))
    pick = jnp.sum(
        jnp.where(ids == target_ref[...], x_nat, jnp.zeros_like(x_nat)),
        axis=-1, keepdims=True).astype(jnp.float32)
    nll_ref[...] = lse - pick


def _ce_nll_tiled_kernel(logits_ref, target_ref, nll_ref,
                         m_acc, l_acc, pick_acc,
                         *, n_classes, need_lane_mask):
    """One (row-tile, class-tile) grid step of online-logsumexp cross entropy.

    logits_ref: (TN, TC) native dtype   target_ref: (TN, 1) int32
    nll_ref:    (TN, 1)  float32 (written on the last class tile)
    scratch:    m_acc / l_acc / pick_acc  (TN, 1) float32
    """
    j = pl.program_id(1)
    n_c_tiles = pl.num_programs(1)

    @pl.when(j == 0)
    def _init():
        m_acc[...] = jnp.full_like(m_acc, -jnp.inf)
        l_acc[...] = jnp.zeros_like(l_acc)
        pick_acc[...] = jnp.zeros_like(pick_acc)

    x_nat = logits_ref[...]                       # (TN, TC) native dtype
    x = x_nat.astype(jnp.float32)                 # f32 for exp / accumulation
    tn, tc = x.shape
    off = j * tc                                  # global class id of lane 0
    tgt_local = target_ref[...] - off             # (TN, 1) tile-local target id
    local_ids = jax.lax.broadcasted_iota(jnp.int32, (tn, tc), 1)

    m_prev = m_acc[...]

    def _plain(_):
        # interior tile: every class lane is valid -> no masking work
        bmax = jnp.max(x_nat, axis=-1, keepdims=True).astype(jnp.float32)
        m_new = jnp.maximum(m_prev, bmax)
        p_sum = jnp.sum(jnp.exp(x - m_new), axis=-1, keepdims=True)
        return m_new, p_sum

    def _masked(_):
        # last class tile: lanes >= (n_classes - off) are grid padding (garbage)
        lane_valid = local_ids < (n_classes - off)
        bmax = jnp.max(jnp.where(lane_valid, x, -jnp.inf),
                       axis=-1, keepdims=True)
        m_new = jnp.maximum(m_prev, bmax)
        p = jnp.where(lane_valid, jnp.exp(x - m_new), 0.0)
        p_sum = jnp.sum(p, axis=-1, keepdims=True)
        return m_new, p_sum

    if need_lane_mask:
        m_new, p_sum = jax.lax.cond(j == n_c_tiles - 1, _masked, _plain, 0)
    else:
        m_new, p_sum = _plain(0)

    # online logsumexp accumulator update
    l_acc[...] = l_acc[...] * jnp.exp(m_prev - m_new) + p_sum
    m_acc[...] = m_new

    # gather the logit at the target class via iota match (no dynamic gather);
    # padded lanes / ignore_index never match a tile-local class id, so they
    # contribute 0.
    pick_acc[...] += jnp.sum(
        jnp.where(local_ids == tgt_local, x_nat, jnp.zeros_like(x_nat)),
        axis=-1, keepdims=True).astype(jnp.float32)

    @pl.when(j == n_c_tiles - 1)
    def _finalize():
        # per-sample NLL = logsumexp - picked_logit
        nll_ref[...] = m_acc[...] + jnp.log(l_acc[...]) - pick_acc[...]


# ---------------------------------------------------------------------------
# Wrapper
# ---------------------------------------------------------------------------

def _pick_row_tile(n, tile_n):
    """Row-tile size: multiple of 8, and >= 2 row tiles whenever N > 8 so the
    'parallel' grid axis can be sharded across both v7x TensorCores."""
    if n <= 8:
        return n
    if n <= tile_n:
        tn = ((pl.cdiv(n, 2) + 7) // 8) * 8
        return tn if tn < n else 8
    return tile_n


def classification_loss(output, target, *, ignore_index=-100,
                        tile_n=256, tile_c=4096):
    """output: (N, C) float logits (f32 or bf16); target: (N,) int class ids.

    Returns a scalar float32 loss == nn.CrossEntropyLoss(reduction='mean').
    """
    assert output.ndim == 2, "expected (N, C) logits"
    assert tile_n % 8 == 0, "tile_n must be a multiple of 8 (sublanes)"
    assert tile_c % 128 == 0, "tile_c must be a multiple of 128 (lanes)"
    n, c = output.shape

    tn = _pick_row_tile(n, tile_n)
    tc = c if c <= tile_c else tile_c

    target2d = target.astype(jnp.int32).reshape(n, 1)

    # VMEM budget: double-buffered logits block dominates; cap at 64 MiB so the
    # same setting is valid on v7x (64 MiB physical) and lifts v5e's 16 MiB
    # default when larger tiles are requested.
    blk_bytes = tn * tc * output.dtype.itemsize
    vmem_limit = int(min(64 * 1024 * 1024,
                         max(32 * 1024 * 1024, 3 * blk_bytes)))

    if c <= tile_c:
        # -------- fast path: single class tile, plain per-row softmax-CE -----
        nll = pl.pallas_call(
            _ce_nll_single_kernel,
            out_shape=jax.ShapeDtypeStruct((n, 1), jnp.float32),
            grid_spec=pltpu.PrefetchScalarGridSpec(
                num_scalar_prefetch=0,
                grid=(pl.cdiv(n, tn),),
                in_specs=[
                    pl.BlockSpec((tn, c), lambda i: (i, 0)),   # logits row tile
                    pl.BlockSpec((tn, 1), lambda i: (i, 0)),   # targets
                ],
                out_specs=pl.BlockSpec((tn, 1), lambda i: (i, 0)),
            ),
            compiler_params=pltpu.CompilerParams(
                dimension_semantics=("parallel",),
                vmem_limit_bytes=vmem_limit,
            ),
        )(output, target2d)
    else:
        # -------- tiled path: online logsumexp over class tiles --------------
        kernel = functools.partial(
            _ce_nll_tiled_kernel,
            n_classes=c,
            need_lane_mask=(c % tc != 0),
        )
        nll = pl.pallas_call(
            kernel,
            out_shape=jax.ShapeDtypeStruct((n, 1), jnp.float32),
            grid_spec=pltpu.PrefetchScalarGridSpec(
                num_scalar_prefetch=0,
                grid=(pl.cdiv(n, tn), pl.cdiv(c, tc)),
                in_specs=[
                    pl.BlockSpec((tn, tc), lambda i, j: (i, j)),  # logits tile
                    pl.BlockSpec((tn, 1), lambda i, j: (i, 0)),   # targets
                ],
                out_specs=pl.BlockSpec((tn, 1), lambda i, j: (i, 0)),
                scratch_shapes=[
                    pltpu.VMEM((tn, 1), jnp.float32),   # running max m
                    pltpu.VMEM((tn, 1), jnp.float32),   # running exp-sum l
                    pltpu.VMEM((tn, 1), jnp.float32),   # picked target logit
                ],
            ),
            compiler_params=pltpu.CompilerParams(
                dimension_semantics=("parallel", "arbitrary"),
                vmem_limit_bytes=vmem_limit,
            ),
        )(output, target2d)

    # mean over non-ignored samples (PyTorch ignore_index=-100 semantics).
    # NOTE: if every target is ignored this is 0/0 = NaN, matching PyTorch.
    valid = target != ignore_index
    total = jnp.sum(jnp.where(valid, nll[:, 0], 0.0))
    count = jnp.sum(valid.astype(jnp.float32))
    return total / count


def _reference_loss(output, target, ignore_index=-100):
    # pure-JAX reference matching nn.CrossEntropyLoss(reduction='mean')
    logits = output.astype(jnp.float32)
    logp = jax.nn.log_softmax(logits, axis=-1)
    valid = target != ignore_index
    safe_t = jnp.where(valid, target, 0).astype(jnp.int32)
    nll = -jnp.take_along_axis(logp, safe_t[:, None], axis=-1)[:, 0]
    return jnp.sum(jnp.where(valid, nll, 0.0)) / jnp.sum(valid).astype(jnp.float32)


if __name__ == "__main__":
    key = jax.random.PRNGKey(0)
    k1, k2, k3, k4, k5, k6 = jax.random.split(key, 6)

    # Case 1 (tiled path): multiple row tiles, class tiles with a padded last
    # tile (exercises the lax.cond masked branch), plus ignore_index handling.
    N1, C1 = 20, 300
    logits1 = jax.random.normal(k1, (N1, C1), dtype=jnp.float32)
    target1 = jax.random.randint(k2, (N1,), 0, C1, dtype=jnp.int32)
    target1 = target1.at[3].set(-100)  # ignored sample (PyTorch default)

    loss1 = classification_loss(logits1, target1, tile_c=128)
    jax.block_until_ready(loss1)
    ref1 = _reference_loss(logits1, target1)
    assert jnp.allclose(loss1, ref1, rtol=1e-5, atol=1e-5), (loss1, ref1)

    # Case 2 (fast path): whole problem in one block, C not a multiple of 128.
    N2, C2 = 8, 16
    logits2 = jax.random.normal(k3, (N2, C2), dtype=jnp.float32)
    target2 = jax.random.randint(k4, (N2,), 0, C2, dtype=jnp.int32)

    loss2 = classification_loss(logits2, target2)
    jax.block_until_ready(loss2)
    ref2 = _reference_loss(logits2, target2)
    assert jnp.allclose(loss2, ref2, rtol=1e-5, atol=1e-5), (loss2, ref2)

    # Case 3 (bf16, tiled path): native-dtype streaming + f32 in-kernel math.
    N3, C3 = 32, 200
    logits3 = jax.random.normal(k5, (N3, C3), dtype=jnp.float32).astype(jnp.bfloat16)
    target3 = jax.random.randint(k6, (N3,), 0, C3, dtype=jnp.int32)

    loss3 = classification_loss(logits3, target3, tile_c=128)
    jax.block_until_ready(loss3)
    ref3 = _reference_loss(logits3, target3)
    assert jnp.allclose(loss3, ref3, rtol=1e-4, atol=1e-4), (loss3, ref3)

    print("KERNEL_OK")
</pallas_src>

<mosaic_0001>
module attributes {stable_mosaic.version = 11 : i64} {
  func.func @_ce_nll_tiled_kernel(%arg0: i32, %arg1: i32, %arg2: memref<16x128xf32, #tpu.memory_space<vmem>>, %arg3: memref<16x1xi32, #tpu.memory_space<vmem>>, %arg4: memref<16x1xf32, #tpu.memory_space<vmem>>, %arg5: memref<16x1xf32, #tpu.memory_space<vmem>>, %arg6: memref<16x1xf32, #tpu.memory_space<vmem>>, %arg7: memref<16x1xf32, #tpu.memory_space<vmem>>) attributes {dimension_semantics = [#tpu.dimension_semantics<parallel>, #tpu.dimension_semantics<arbitrary>], iteration_bounds = array<i64: 2, 3>, scalar_prefetch = 0 : i64, scratch_operands = 3 : i64, tpu.core_type = #tpu.core_type<tc>, window_params = [{transform_indices = @transform_0, window_bounds = array<i64: 16, 128>}, {transform_indices = @transform_1, window_bounds = array<i64: 16, 1>}, {transform_indices = @transform_2, window_bounds = array<i64: 16, 1>}]} {
    %c0_i32 = arith.constant 0 : i32
    %0 = arith.cmpi eq, %arg1, %c0_i32 : i32
    %1 = arith.extui %0 : i1 to i32
    %c0_i32_0 = arith.constant 0 : i32
    %2 = arith.cmpi ne, %1, %c0_i32_0 : i32
    scf.if %2 {
      %cst_20 = arith.constant 0xFF800000 : f32
      %33 = vector.broadcast %cst_20 : f32 to vector<16x1xf32>
      %c0_21 = arith.constant 0 : index
      %c0_22 = arith.constant 0 : index
      %34 = vector.load %arg5[%c0_21, %c0_22] : memref<16x1xf32, #tpu.memory_space<vmem>>, vector<16x1xf32>
      tpu.vector_store %arg5[%c0_21, %c0_22], %33 {strides = array<i32>} : memref<16x1xf32, #tpu.memory_space<vmem>>, vector<16x1xf32>,
      %cst_23 = arith.constant 0.000000e+00 : f32
      %35 = vector.broadcast %cst_23 : f32 to vector<16x1xf32>
      %c0_24 = arith.constant 0 : index
      %c0_25 = arith.constant 0 : index
      %36 = vector.load %arg6[%c0_24, %c0_25] : memref<16x1xf32, #tpu.memory_space<vmem>>, vector<16x1xf32>
      tpu.vector_store %arg6[%c0_24, %c0_25], %35 {strides = array<i32>} : memref<16x1xf32, #tpu.memory_space<vmem>>, vector<16x1xf32>,
      %cst_26 = arith.constant 0.000000e+00 : f32
      %37 = vector.broadcast %cst_26 : f32 to vector<16x1xf32>
      %c0_27 = arith.constant 0 : index
      %c0_28 = arith.constant 0 : index
      %38 = vector.load %arg7[%c0_27, %c0_28] : memref<16x1xf32, #tpu.memory_space<vmem>>, vector<16x1xf32>
      tpu.vector_store %arg7[%c0_27, %c0_28], %37 {strides = array<i32>} : memref<16x1xf32, #tpu.memory_space<vmem>>, vector<16x1xf32>,
    } else {
    }
    %c0 = arith.constant 0 : index
    %c0_1 = arith.constant 0 : index
    %3 = vector.load %arg2[%c0, %c0_1] : memref<16x128xf32, #tpu.memory_space<vmem>>, vector<16x128xf32>
    %c128_i32 = arith.constant 128 : i32
    %4 = arith.muli %arg1, %c128_i32 : i32
    %c0_2 = arith.constant 0 : index
    %c0_3 = arith.constant 0 : index
    %5 = vector.load %arg3[%c0_2, %c0_3] : memref<16x1xi32, #tpu.memory_space<vmem>>, vector<16x1xi32>
    %6 = vector.broadcast %4 : i32 to vector<16x1xi32>
    %7 = arith.subi %5, %6 : vector<16x1xi32>
    %8 = tpu.iota {dimensions = array<i32: 1>} : vector<16x128xi32>
    %c0_4 = arith.constant 0 : index
    %c0_5 = arith.constant 0 : index
    %9 = vector.load %arg5[%c0_4, %c0_5] : memref<16x1xf32, #tpu.memory_space<vmem>>, vector<16x1xf32>
    %c2_i32 = arith.constant 2 : i32
    %10 = arith.cmpi eq, %arg1, %c2_i32 : i32
    %11 = arith.extui %10 : i1 to i32
    %c0_i32_6 = arith.constant 0 : i32
    %12 = arith.cmpi ne, %11, %c0_i32_6 : i32
    %13:2 = scf.if %12 -> (vector<16x1xf32>, vector<16x1xf32>) {
      %c300_i32 = arith.constant 300 : i32
      %33 = arith.subi %c300_i32, %4 : i32
      %34 = vector.broadcast %33 : i32 to vector<16x128xi32>
      %35 = arith.cmpi slt, %8, %34 : vector<16x128xi32>
      %cst_20 = arith.constant 0xFF800000 : f32
      %36 = vector.broadcast %cst_20 : f32 to vector<16x128xf32>
      %37 = arith.select %35, %3, %36 : vector<16x128xi1>, vector<16x128xf32>
      %cst_21 = arith.constant dense<0xFF800000> : vector<16xf32>
      %38 = vector.multi_reduction <maximumf>, %37, %cst_21 [1] : vector<16x128xf32> to vector<16xf32>
      %39 = vector.shape_cast %38 : vector<16xf32> to vector<16x1xf32>
      %40 = arith.maximumf %9, %39 : vector<16x1xf32>
      %41 = vector.broadcast %40 : vector<16x1xf32> to vector<16x128xf32>
      %42 = arith.subf %3, %41 : vector<16x128xf32>
      %43 = math.exp %42 : vector<16x128xf32>
      %cst_22 = arith.constant 0.000000e+00 : f32
      %44 = vector.broadcast %cst_22 : f32 to vector<16x128xf32>
      %45 = arith.select %35, %43, %44 : vector<16x128xi1>, vector<16x128xf32>
      %cst_23 = arith.constant dense<0.000000e+00> : vector<16xf32>
      %46 = vector.multi_reduction <add>, %45, %cst_23 [1] : vector<16x128xf32> to vector<16xf32>
      %47 = vector.shape_cast %46 : vector<16xf32> to vector<16x1xf32>
      scf.yield %40, %47 : vector<16x1xf32>, vector<16x1xf32>
    } else {
      %cst_20 = arith.constant dense<0xFF800000> : vector<16xf32>
      %33 = vector.multi_reduction <maximumf>, %3, %cst_20 [1] : vector<16x128xf32> to vector<16xf32>
      %34 = vector.shape_cast %33 : vector<16xf32> to vector<16x1xf32>
      %35 = arith.maximumf %9, %34 : vector<16x1xf32>
      %36 = vector.broadcast %35 : vector<16x1xf32> to vector<16x128xf32>
      %37 = arith.subf %3, %36 : vector<16x128xf32>
      %38 = math.exp %37 : vector<16x128xf32>
      %cst_21 = arith.constant dense<0.000000e+00> : vector<16xf32>
      %39 = vector.multi_reduction <add>, %38, %cst_21 [1] : vector<16x128xf32> to vector<16xf32>
      %40 = vector.shape_cast %39 : vector<16xf32> to vector<16x1xf32>
      scf.yield %35, %40 : vector<16x1xf32>, vector<16x1xf32>
    }
    %c0_7 = arith.constant 0 : index
    %c0_8 = arith.constant 0 : index
    %14 = vector.load %arg6[%c0_7, %c0_8] : memref<16x1xf32, #tpu.memory_space<vmem>>, vector<16x1xf32>
    %15 = arith.subf %9, %13#0 : vector<16x1xf32>
    %16 = math.exp %15 : vector<16x1xf32>
    %17 = arith.mulf %14, %16 : vector<16x1xf32>
    %18 = arith.addf %17, %13#1 : vector<16x1xf32>
    %c0_9 = arith.constant 0 : index
    %c0_10 = arith.constant 0 : index
    %19 = vector.load %arg6[%c0_9, %c0_10] : memref<16x1xf32, #tpu.memory_space<vmem>>, vector<16x1xf32>
    tpu.vector_store %arg6[%c0_9, %c0_10], %18 {strides = array<i32>} : memref<16x1xf32, #tpu.memory_space<vmem>>, vector<16x1xf32>,
    %c0_11 = arith.constant 0 : index
    %c0_12 = arith.constant 0 : index
    %20 = vector.load %arg5[%c0_11, %c0_12] : memref<16x1xf32, #tpu.memory_space<vmem>>, vector<16x1xf32>
    tpu.vector_store %arg5[%c0_11, %c0_12], %13#0 {strides = array<i32>} : memref<16x1xf32, #tpu.memory_space<vmem>>, vector<16x1xf32>,
    %c0_13 = arith.constant 0 : index
    %c0_14 = arith.constant 0 : index
    %21 = vector.load %arg7[%c0_13, %c0_14] : memref<16x1xf32, #tpu.memory_space<vmem>>, vector<16x1xf32>
    %22 = vector.broadcast %7 : vector<16x1xi32> to vector<16x128xi32>
    %23 = arith.cmpi eq, %8, %22 : vector<16x128xi32>
    %cst = arith.constant 0.000000e+00 : f32
    %24 = vector.broadcast %cst : f32 to vector<16x128xf32>
    %25 = arith.select %23, %3, %24 : vector<16x128xi1>, vector<16x128xf32>
    %cst_15 = arith.constant dense<0.000000e+00> : vector<16xf32>
    %26 = vector.multi_reduction <add>, %25, %cst_15 [1] : vector<16x128xf32> to vector<16xf32>
    %27 = vector.shape_cast %26 : vector<16xf32> to vector<16x1xf32>
    %28 = arith.addf %21, %27 : vector<16x1xf32>
    %c0_16 = arith.constant 0 : index
    %c0_17 = arith.constant 0 : index
    %29 = vector.load %arg7[%c0_16, %c0_17] : memref<16x1xf32, #tpu.memory_space<vmem>>, vector<16x1xf32>
    tpu.vector_store %arg7[%c0_16, %c0_17], %28 {strides = array<i32>} : memref<16x1xf32, #tpu.memory_space<vmem>>, vector<16x1xf32>,
    %c2_i32_18 = arith.constant 2 : i32
    %30 = arith.cmpi eq, %arg1, %c2_i32_18 : i32
    %31 = arith.extui %30 : i1 to i32
    %c0_i32_19 = arith.constant 0 : i32
    %32 = arith.cmpi ne, %31, %c0_i32_19 : i32
    scf.if %32 {
      %c0_20 = arith.constant 0 : index
      %c0_21 = arith.constant 0 : index
      %33 = vector.load %arg5[%c0_20, %c0_21] : memref<16x1xf32, #tpu.memory_space<vmem>>, vector<16x1xf32>
      %c0_22 = arith.constant 0 : index
      %c0_23 = arith.constant 0 : index
      %34 = vector.load %arg6[%c0_22, %c0_23] : memref<16x1xf32, #tpu.memory_space<vmem>>, vector<16x1xf32>
      %35 = math.log %34 : vector<16x1xf32>
      %36 = arith.addf %33, %35 : vector<16x1xf32>
      %c0_24 = arith.constant 0 : index
      %c0_25 = arith.constant 0 : index
      %37 = vector.load %arg7[%c0_24, %c0_25] : memref<16x1xf32, #tpu.memory_space<vmem>>, vector<16x1xf32>
      %38 = arith.subf %36, %37 : vector<16x1xf32>
      %c0_26 = arith.constant 0 : index
      %c0_27 = arith.constant 0 : index
      %39 = vector.load %arg4[%c0_26, %c0_27] : memref<16x1xf32, #tpu.memory_space<vmem>>, vector<16x1xf32>
      tpu.vector_store %arg4[%c0_26, %c0_27], %38 {strides = array<i32>} : memref<16x1xf32, #tpu.memory_space<vmem>>, vector<16x1xf32>,
    } else {
    }
    return
  }
  func.func @transform_0(%arg0: i32, %arg1: i32) -> (i32, i32) {
    %c0_i32 = arith.constant 0 : i32
    return %arg0, %arg1 : i32, i32
  }
  func.func @transform_1(%arg0: i32, %arg1: i32) -> (i32, i32) {
    %c0_i32 = arith.constant 0 : i32
    %c0_i32_0 = arith.constant 0 : i32
    return %arg0, %c0_i32 : i32, i32
  }
  func.func @transform_2(%arg0: i32, %arg1: i32) -> (i32, i32) {
    %c0_i32 = arith.constant 0 : i32
    %c0_i32_0 = arith.constant 0 : i32
    return %arg0, %c0_i32 : i32, i32
  }
}

</mosaic_0001>

<llo_original>
// kernel: tpu_custom_call.1
$region0: #{tpu_custom_call.1}
  #allocation0 [shape = 'u32[]', space=smem, size = 0x4, offset = 0x4, fixed_abs, tag = 'smem constant byte address 0x4 - core index']
  #allocation1 [shape = 'u32[144,128]{1,0:T(1,128)}', space=vmem, size = 0x12000, scoped, tag = 'internal scratch']
  #allocation2 [shape = 'f32[16,1]{1,0:T(8,128)}', space=vmem, size = 0x2000, scoped, tag = 'scratch operand']
  #allocation3 [shape = 'f32[16,1]{1,0:T(8,128)}', space=vmem, size = 0x2000, scoped, tag = 'scratch operand']
  #allocation4 [shape = 'f32[16,1]{1,0:T(8,128)}', space=vmem, size = 0x2000, scoped, tag = 'scratch operand']
  %s0 = inlined_call_operand.hbm [shape: f32[20,300], index: 0, kind: input, shape index: {}]
  %s1 = inlined_call_operand.vmem [shape: s32[20,1], index: 1, kind: input, shape index: {}]
  %s2 = inlined_call_operand.vmem [shape: f32[20,1], index: 2, kind: output, shape index: {}]
  %s3 = sld [smem:[#allocation0]]
  $region109: #{tpu_custom_call.1} parent=0
    _
  %s5 = ssub.s32 1, %s3
  %s6 = scalar_select 0, %s5, %s3
  $region1: #{tpu_custom_call.1} parent=0
    #allocation5 [shape = 'u8[16384]{0}', space=vmem, size = 0x4000, scoped, tag = 'input window, operand 0']
    #allocation6 [shape = 's32[2]{0}', space=sflag, size = 0x8, scoped, tag = 'scoped memory for tpu_custom_call.1']
    #allocation7 [shape = 'u8[16384]{0}', space=vmem, size = 0x4000, scoped, tag = 'output window, operand 0']
    %7 = vsyncpa [#allocation6], 0
    %s8 = scalar_lea.sflag [#allocation6], 1
    %9 = vsyncpa %s8, 0
    loop: start=0, step=1, limit=8
    $region2: #{tpu_custom_call.1} parent=1 // loop_pre_header
      _
    $region3: #{tpu_custom_call.1} parent=1 // loop_header
      %s11 = sphi 0, %s15
      %p12 = scmp.ge.s32.totalorder %s11, 8
      %s18 = sphi 0, %s30
      %s19 = sphi 0, %s26
      %s20 = sphi 0, %s18
      %s21 = sphi 0, %s19
      %s22 = sphi 0, %s20
      %s23 = sphi 0, %s21
      %s35 = sphi 0, %s37
      %s38 = sphi 0, %s35
      %s39 = sphi 0, %s38
      %s55 = sphi 0, %s39
      %s61 = sphi 0, %s63
      %s64 = sphi 0, %s61
      %s65 = sphi 0, %s64
      %s81 = sphi 0, %s65
      %s87 = sphi 0, %s89
      %s90 = sphi 0, %s87
      %s91 = sphi 0, %s90
      %s107 = sphi 0, %s91
    $region4: #{tpu_custom_call.1} parent=1 // loop_header_branch
      %14 = sbr.rel (%p12) target = $region8
    $region5: #{tpu_custom_call.1} parent=1 // loop_body
      %s16 = ssub.s32 %s11, 1
      %s17 = ssub.s32 %s11, 2
      %s24 = sadd.s32 1, %s19
      %p25 = scmp.ge.s32.totalorder %s24, 3
      %s26 = scalar_select %p25, 0, %s24
      %s27 = sadd.s32 1, %s18
      %s28 = scalar_select %p25, %s27, %s18
      %p29 = scmp.ge.s32.totalorder %s28, 2
      %s30 = scalar_select %p29, 0, %s28
      %s31 = ssub.s32 %s18, %s30
      %s32 = ssub.s32 %s19, %s26
      %s33 = sor.u32 %s31, %s32
      %p34 = scmp.eq.s32.totalorder %s33, 0
      %s36 = sadd.s32 %s35, 1
      %s37 = scalar_select %p34, %s35, %s36
      %p40 = pneg %p34
      %p41 = scmp.eq.s32.totalorder %s11, 5
      %p42 = por %p40, %p41
      %p43 = scmp.ne.s32.totalorder %s35, %s38
      %p44 = scmp.eq.s32.totalorder %s11, 0
      %p45 = por %p43, %p44
      %p46 = scmp.ne.s32.totalorder %s35, %s38
      %p47 = scmp.eq.s32.totalorder %s16, 5
      %p48 = por %p46, %p47
      %p49 = scmp.ne.s32.totalorder %s38, %s39
      %p50 = scmp.eq.s32.totalorder %s16, 0
      %p51 = por %p49, %p50
      %p52 = scmp.ne.s32.totalorder %s38, %s39
      %p53 = scmp.eq.s32.totalorder %s17, 5
      %p54 = por %p52, %p53
      %p56 = scmp.ne.s32.totalorder %s39, %s55
      %p57 = scmp.eq.s32.totalorder %s17, 0
      %p58 = por %p56, %p57
      %s59 = ssub.s32 %s18, %s30
      %p60 = scmp.eq.s32.totalorder %s59, 0
      %s62 = sadd.s32 %s61, 1
      %s63 = scalar_select %p60, %s61, %s62
      %p66 = pneg %p60
      %p67 = scmp.eq.s32.totalorder %s11, 5
      %p68 = por %p66, %p67
      %p69 = scmp.ne.s32.totalorder %s61, %s64
      %p70 = scmp.eq.s32.totalorder %s11, 0
      %p71 = por %p69, %p70
      %p72 = scmp.ne.s32.totalorder %s61, %s64
      %p73 = scmp.eq.s32.totalorder %s16, 5
      %p74 = por %p72, %p73
      %p75 = scmp.ne.s32.totalorder %s64, %s65
      %p76 = scmp.eq.s32.totalorder %s16, 0
      %p77 = por %p75, %p76
      %p78 = scmp.ne.s32.totalorder %s64, %s65
      %p79 = scmp.eq.s32.totalorder %s17, 5
      %p80 = por %p78, %p79
      %p82 = scmp.ne.s32.totalorder %s65, %s81
      %p83 = scmp.eq.s32.totalorder %s17, 0
      %p84 = por %p82, %p83
      %s85 = ssub.s32 %s18, %s30
      %p86 = scmp.eq.s32.totalorder %s85, 0
      %s88 = sadd.s32 %s87, 1
      %s89 = scalar_select %p86, %s87, %s88
      %p92 = pneg %p86
      %p93 = scmp.eq.s32.totalorder %s11, 5
      %p94 = por %p92, %p93
      %p95 = scmp.ne.s32.totalorder %s87, %s90
      %p96 = scmp.eq.s32.totalorder %s11, 0
      %p97 = por %p95, %p96
      %p98 = scmp.ne.s32.totalorder %s87, %s90
      %p99 = scmp.eq.s32.totalorder %s16, 5
      %p100 = por %p98, %p99
      %p101 = scmp.ne.s32.totalorder %s90, %s91
      %p102 = scmp.eq.s32.totalorder %s16, 0
      %p103 = por %p101, %p102
      %p104 = scmp.ne.s32.totalorder %s90, %s91
      %p105 = scmp.eq.s32.totalorder %s17, 5
      %p106 = por %p104, %p105
      %p108 = scmp.ne.s32.totalorder %s91, %s107
      %p109 = scmp.eq.s32.totalorder %s17, 0
      %p110 = por %p108, %p109
      %p111 = scmp.le.s32.totalorder 1, %s11
      %p112 = scmp.lt.s32.totalorder %s11, 7
      %p113 = pnand %p111, %p112
      %p114 = pneg %p113
      // Predicated region
      $region9: #{tpu_custom_call.1} parent=5 // pred_check
        _
      $region10: #{tpu_custom_call.1} parent=5 // pred_check_branch
        %116 = sbr.rel (%p113) target = $region12
      $region11: #{tpu_custom_call.1} parent=5 // pred_region
        %s117 = ssub.s32 %s11, 1
      $region12: #{tpu_custom_call.1} parent=5 // pred_fallthru
        _
      %p118 = scmp.lt.s32.totalorder %s11, 6
      // Predicated region
      $region13: #{tpu_custom_call.1} parent=5 // pred_check
        %p119 = pneg %p118
      $region14: #{tpu_custom_call.1} parent=5 // pred_check_branch
        %121 = sbr.rel (%p119) target = $region16
      $region15: #{tpu_custom_call.1} parent=5 // pred_region
        // Predicated region
        $region17: #{tpu_custom_call.1} parent=15 // pred_check
          %p122 = pneg %p45
        $region18: #{tpu_custom_call.1} parent=15 // pred_check_branch
          %124 = sbr.rel (%p122) target = $region20
        $region19: #{tpu_custom_call.1} parent=15 // pred_region
          %s125 = sand.u32 %s35, 1
          %s126 = scalar_lea.sflag [#allocation6], %s125
          %s127 = sand.u32 %s35, 1
          %s128 = smul.addr %s127, 16
          %s129 = scalar_lea.vmem [#allocation5], %s128
          %s130 = smul.u32 2, %s18
          %s131 = ssub.s32 3, %s130
          %p132 = scmp.lt.s32.totalorder %s131, 2
          %s133 = scalar_select %p132, %s131, 2
          %s134 = smul.u32 128, %s133
          %s136 = ssub.s32 256, %s134
          %137 = vsyncadd %s126, %s136
          %p138 = scmp.ne.s32.totalorder 0, %s134
          %s139 = smul.addr %s130, 3
          %s140 = sadd.s32 %s19, %s139
          %s141 = smul.addr %s140, 128
          %s142 = scalar_lea.hbm %s0, %s141
          %s143 = smul.u32 8, %s133
          %s144 = sshll.u32 %s129, 4
          %s145 = int_to_ptr.vmem [resolvable:$true] %s144
          %s146 = sshll.u32 %s143, 4
          %150 = dma.hbm_to_vmem [thread:$0]  (%p138), %s142, %s146, %s145, %s126, 384, 128, 8
        $region20: #{tpu_custom_call.1} parent=15 // pred_fallthru
          _
        // Predicated region
        $region21: #{tpu_custom_call.1} parent=15 // pred_check
          %p151 = pneg %p71
        $region22: #{tpu_custom_call.1} parent=15 // pred_check_branch
          %153 = sbr.rel (%p151) target = $region24
        $region23: #{tpu_custom_call.1} parent=15 // pred_region
          %s154 = smul.u32 2, %s18
          %s155 = ssub.s32 3, %s154
          %p156 = scmp.lt.s32.totalorder %s155, 2
          %s157 = scalar_select %p156, %s155, 2
          %s158 = smul.u32 128, %s157
          %p159 = scmp.lt.s32.totalorder %s154, 2
          %s160 = scalar_select %p159, %s154, 2
          %s161 = smul.addr %s160, 8
          %s162 = scalar_lea.vmem %s1, %s161
          %s163 = smul.u32 2, %s18
          %s164 = ssub.s32 3, %s163
          %p165 = scmp.lt.s32.totalorder %s164, 2
          %s166 = scalar_select %p165, %s164, 2
          %s167 = smul.u32 128, %s166
        $region24: #{tpu_custom_call.1} parent=15 // pred_fallthru
          _
      $region16: #{tpu_custom_call.1} parent=5 // pred_fallthru
        _
      %p168 = scmp.le.s32.totalorder 1, %s11
      %p169 = scmp.lt.s32.totalorder %s11, 7
      %p170 = pnand %p168, %p169
      %p171 = pneg %p170
      // Predicated region
      $region25: #{tpu_custom_call.1} parent=5 // pred_check
        _
      $region26: #{tpu_custom_call.1} parent=5 // pred_check_branch
        %173 = sbr.rel (%p170) target = $region28
      $region27: #{tpu_custom_call.1} parent=5 // pred_region
        %s174 = ssub.s32 %s11, 1
        %s175 = sand.u32 %s38, 1
        %s176 = scalar_lea.sflag [#allocation6], %s175
        %s177 = sand.u32 %s38, 1
        %s178 = smul.addr %s177, 16
        %s179 = scalar_lea.vmem [#allocation5], %s178
        // Predicated region
        $region29: #{tpu_custom_call.1} parent=27 // pred_check
          %p180 = pneg %p51
        $region30: #{tpu_custom_call.1} parent=27 // pred_check_branch
          %182 = sbr.rel (%p180) target = $region32
        $region31: #{tpu_custom_call.1} parent=27 // pred_region
          %183 = dma.done %s176, 256
        $region32: #{tpu_custom_call.1} parent=27 // pred_fallthru
          _
        %s184 = sand.u32 %s38, 1
        %s185 = scalar_lea.sflag [#allocation6], %s184
        %s186 = sand.u32 %s38, 1
        %s187 = smul.addr %s186, 16
        %s188 = scalar_lea.vmem [#allocation5], %s187
        %p189 = pneg %p51
        %p190 = pneg %p48
        %s191 = smul.u32 2, %s20
        %s192 = ssub.s32 3, %s191
        %p193 = scmp.lt.s32.totalorder %s192, 2
        %s194 = scalar_select %p193, %s192, 2
        %s195 = smul.u32 128, %s194
        %p196 = scmp.lt.s32.totalorder %s191, 2
        %s197 = scalar_select %p196, %s191, 2
        %s198 = smul.addr %s197, 8
        %s199 = scalar_lea.vmem %s1, %s198
        %p200 = pneg %p77
        %p201 = pneg %p74
        %p202 = pneg %p103
        %p203 = pneg %p100
        %s204 = sand.u32 %s90, 1
        %s205 = sand.u32 %s90, 1
        %s206 = smul.addr %s205, 16
        %s207 = scalar_lea.vmem [#allocation7], %s206
        %s208 = smul.u32 2, %s20
        %s209 = ssub.s32 3, %s208
        %p210 = scmp.lt.s32.totalorder %s209, 2
        %s211 = scalar_select %p210, %s209, 2
        %s212 = smul.u32 128, %s211
        %s213 = smul.u32 2, %s20
        %s214 = ssub.s32 3, %s213
        %p215 = scmp.lt.s32.totalorder %s214, 2
        %s216 = scalar_select %p215, %s214, 2
        %s217 = smul.u32 128, %s216
        %p218 = scmp.lt.s32.totalorder %s213, 2
        %s219 = scalar_select %p218, %s213, 2
        %s220 = smul.addr %s219, 8
        %s221 = scalar_lea.vmem %s1, %s220
        %s222 = smul.u32 2, %s20
        %s223 = ssub.s32 3, %s222
        %p224 = scmp.lt.s32.totalorder %s223, 2
        %s225 = scalar_select %p224, %s223, 2
        %s226 = smul.u32 128, %s225
        %s227 = smul.u32 2, %s20
        %s228 = ssub.s32 3, %s227
        %p229 = scmp.lt.s32.totalorder %s228, 2
        %s230 = scalar_select %p229, %s228, 2
        %s231 = smul.u32 128, %s230
        %p232 = scmp.eq.s32.totalorder %s21, 0
        // Predicated region
        $region33: #{tpu_custom_call.1} parent=27 // pred_check
          %p233 = pneg %p232
        $region34: #{tpu_custom_call.1} parent=27 // pred_check_branch
          %235 = sbr.rel (%p233) target = $region36
        $region35: #{tpu_custom_call.1} parent=27 // pred_region
          %vm236 = vcmask 7168
          %237 = vst.msk [vmem:[#allocation2] sm:$0xff] %vm236, -inf
          %238 = vst.msk [vmem:[#allocation2 + $0x8] sm:$0xff] %vm236, -inf
          %239 = vst.msk [vmem:[#allocation3] sm:$0xff] %vm236, 0.0
          %240 = vst.msk [vmem:[#allocation3 + $0x8] sm:$0xff] %vm236, 0.0
          %241 = vst.msk [vmem:[#allocation4] sm:$0xff] %vm236, 0.0
          %242 = vst.msk [vmem:[#allocation4 + $0x8] sm:$0xff] %vm236, 0.0
        $region36: #{tpu_custom_call.1} parent=27 // pred_fallthru
          _
        %v243 = vld [vmem:[%s179] sm:$0xff]
        %v244 = vld [vmem:[%s179 + $0x8] sm:$0xff]
        %s245 = smul.u32 %s21, 128
        %v246 = vld [vmem:[%s221] sm:$0xff]
        %v247 = vld [vmem:[%s221 + $0x8] sm:$0xff]
        %v248 = vstv %s245
        %v249 = vsub.s32 %v246, %v248
        %v250 = vsub.s32 %v247, %v248
        %v251 = vlaneseq
        %v252 = vand.u32 %v251, 127
        %v253 = vld [vmem:[#allocation2] sm:$0xff]
        %v254 = vld [vmem:[#allocation2 + $0x8] sm:$0xff]
        %p255 = scmp.eq.s32.totalorder %s21, 2
        // Predicated region
        $region37: #{tpu_custom_call.1} parent=27 // pred_check
          %p256 = pneg %p255
        $region38: #{tpu_custom_call.1} parent=27 // pred_check_branch
          %258 = sbr.rel (%p256) target = $region40
        $region39: #{tpu_custom_call.1} parent=27 // pred_region
          %s259 = ssub.s32 300, %s245
          %v260 = vstv %s259
          %vm261 = vcmp.lt.s32.totalorder %v252, %v260
          %v262 = vsel %vm261, %v243, -inf
          %v263 = vsel %vm261, %v244, -inf
          %264 = vmax.xlane.f32.xlu0 %v262
          %v265 = vpop.xlane.xlu0 %264
          %266 = vmax.xlane.f32.xlu0 %v263
          %v267 = vpop.xlane.xlu0 %266
          %v268 = vmax.f32 %v253, %v265
          %v269 = vmax.f32 %v254, %v267
          %271 = vset.pattern.permute.xlu0 0
          %272 = vperm.xlu0 %271, %v268
          %v273 = vpop.permute.xlu0 %272
          %276 = vset.pattern.permute.xlu0 0
          %277 = vperm.xlu0 %276, %v269
          %v278 = vpop.permute.xlu0 %277
          %v280 = vsub.f32 %v243, %v273
          %v281 = vsub.f32 %v244, %v278
          %v282 = vmul.f32 %v280, 1.442695
          %v283 = vpow.pop %v282
          %v284 = vmul.f32 %v281, 1.442695
          %v285 = vpow.pop %v284
          %v286 = vsel %vm261, %v283, 0.0
          %v287 = vsel %vm261, %v285, 0.0
          %288 = vadd.xlane.f32.xlu0 %v286
          %v289 = vpop.xlane.xlu0 %288
          %290 = vadd.xlane.f32.xlu0 %v287
          %v291 = vpop.xlane.xlu0 %290
        $region40: #{tpu_custom_call.1} parent=27 // pred_fallthru
          %v292 = vphi 0, %v268
          %v293 = vphi 0, %v269
          %v294 = vphi 0, %v289
          %v295 = vphi 0, %v291
        %p296 = pneg %p255
        // Predicated region
        $region41: #{tpu_custom_call.1} parent=27 // pred_check
          _
        $region42: #{tpu_custom_call.1} parent=27 // pred_check_branch
          %298 = sbr.rel (%p255) target = $region44
        $region43: #{tpu_custom_call.1} parent=27 // pred_region
          %299 = vmax.xlane.f32.xlu0 %v243
          %v300 = vpop.xlane.xlu0 %299
          %301 = vmax.xlane.f32.xlu0 %v244
          %v302 = vpop.xlane.xlu0 %301
          %v303 = vmax.f32 %v253, %v300
          %v304 = vmax.f32 %v254, %v302
          %306 = vset.pattern.permute.xlu0 0
          %307 = vperm.xlu0 %306, %v303
          %v308 = vpop.permute.xlu0 %307
          %311 = vset.pattern.permute.xlu0 0
          %312 = vperm.xlu0 %311, %v304
          %v313 = vpop.permute.xlu0 %312
          %v315 = vsub.f32 %v243, %v308
          %v316 = vsub.f32 %v244, %v313
          %v317 = vmul.f32 %v315, 1.442695
          %v318 = vpow.pop %v317
          %v319 = vmul.f32 %v316, 1.442695
          %v320 = vpow.pop %v319
          %321 = vadd.xlane.f32.xlu0 %v318
          %v322 = vpop.xlane.xlu0 %321
          %323 = vadd.xlane.f32.xlu0 %v320
          %v324 = vpop.xlane.xlu0 %323
        $region44: #{tpu_custom_call.1} parent=27 // pred_fallthru
          %v325 = vphi %v292, %v303
          %v326 = vphi %v293, %v304
          %v327 = vphi %v294, %v322
          %v328 = vphi %v295, %v324
        %v329 = vld [vmem:[#allocation3] sm:$0xff]
        %v330 = vld [vmem:[#allocation3 + $0x8] sm:$0xff]
        %v331 = vsub.f32 %v253, %v325
        %v332 = vsub.f32 %v254, %v326
        %v333 = vmul.f32 %v331, 1.442695
        %v334 = vpow.pop %v333
        %v335 = vmul.f32 %v332, 1.442695
        %v336 = vpow.pop %v335
        %v337 = vmul.f32 %v329, %v334
        %v338 = vmul.f32 %v330, %v336
        %v339 = vadd.f32 %v337, %v327
        %v340 = vadd.f32 %v338, %v328
        %vm341 = vcmask 7168
        %342 = vst.msk [vmem:[#allocation3] sm:$0xff] %vm341, %v339
        %343 = vst.msk [vmem:[#allocation3 + $0x8] sm:$0xff] %vm341, %v340
        %344 = vst.msk [vmem:[#allocation2] sm:$0xff] %vm341, %v325
        %345 = vst.msk [vmem:[#allocation2 + $0x8] sm:$0xff] %vm341, %v326
        %v346 = vld [vmem:[#allocation4] sm:$0xff]
        %v347 = vld [vmem:[#allocation4 + $0x8] sm:$0xff]
        %348 = vset.pattern.permute.xlu0 0
        %349 = vperm.xlu0 %348, %v249
        %v350 = vpop.permute.xlu0 %349
        %351 = vset.pattern.permute.xlu0 0
        %352 = vperm.xlu0 %351, %v250
        %v353 = vpop.permute.xlu0 %352
        %vm354 = vcmp.eq.s32.totalorder %v252, %v350
        %vm355 = vcmp.eq.s32.totalorder %v252, %v353
        %v356 = vsel %vm354, %v243, 0.0
        %v357 = vsel %vm355, %v244, 0.0
        %358 = vadd.xlane.f32.xlu0 %v356
        %v359 = vpop.xlane.xlu0 %358
        %360 = vadd.xlane.f32.xlu0 %v357
        %v361 = vpop.xlane.xlu0 %360
        %v362 = vadd.f32 %v346, %v359
        %v363 = vadd.f32 %v347, %v361
        %364 = vst.msk [vmem:[#allocation4] sm:$0xff] %vm341, %v362
        %365 = vst.msk [vmem:[#allocation4 + $0x8] sm:$0xff] %vm341, %v363
        // Predicated region
        $region45: #{tpu_custom_call.1} parent=27 // pred_check
          %p366 = pneg %p255
        $region46: #{tpu_custom_call.1} parent=27 // pred_check_branch
          %368 = sbr.rel (%p366) target = $region48
        $region47: #{tpu_custom_call.1} parent=27 // pred_region
          %v369 = vld [vmem:[#allocation2] sm:$0xff]
          %v370 = vld [vmem:[#allocation2 + $0x8] sm:$0xff]
          %v371 = vld [vmem:[#allocation3] sm:$0xff]
          %v372 = vld [vmem:[#allocation3 + $0x8] sm:$0xff]
          %v373 = vlog2.pop %v371
          %v374 = vmul.f32 %v373, 0.6931472
          %v375 = vlog2.pop %v372
          %v376 = vmul.f32 %v375, 0.6931472
          %v377 = vadd.f32 %v369, %v374
          %v378 = vadd.f32 %v370, %v376
          %v379 = vld [vmem:[#allocation4] sm:$0xff]
          %v380 = vld [vmem:[#allocation4 + $0x8] sm:$0xff]
          %v381 = vsub.f32 %v377, %v379
          %v382 = vsub.f32 %v378, %v380
          %383 = vst.msk [vmem:[%s207] sm:$0xff] %vm341, %v381
          %384 = vst.msk [vmem:[%s207 + $0x8] sm:$0xff] %vm341, %v382
        $region48: #{tpu_custom_call.1} parent=27 // pred_fallthru
          _
        %s385 = sand.u32 %s90, 1
        %s386 = sand.u32 %s90, 1
        %s387 = smul.addr %s386, 16
        %s388 = scalar_lea.vmem [#allocation7], %s387
        // Predicated region
        $region49: #{tpu_custom_call.1} parent=27 // pred_check
          %p389 = pneg %p100
        $region50: #{tpu_custom_call.1} parent=27 // pred_check_branch
          %391 = sbr.rel (%p389) target = $region52
        $region51: #{tpu_custom_call.1} parent=27 // pred_region
          %s392 = smul.u32 2, %s20
          %s393 = ssub.s32 3, %s392
          %p394 = scmp.lt.s32.totalorder %s393, 2
          %s395 = scalar_select %p394, %s393, 2
          %s396 = smul.u32 128, %s395
          %p397 = scmp.ne.s32.totalorder 0, %s396
          %s398 = smul.addr %s392, 8
          %s399 = scalar_lea.vmem %s2, %s398
          // Predicated region
          $region53: #{tpu_custom_call.1} parent=51 // pred_check
            %p400 = pneg %p397
          $region54: #{tpu_custom_call.1} parent=51 // pred_check_branch
            %402 = sbr.rel (%p400) target = $region56
          $region55: #{tpu_custom_call.1} parent=51 // pred_region
            // Predicated region
            $region57: #{tpu_custom_call.1} parent=55 // pred_check
              _
            $region58: #{tpu_custom_call.1} parent=55 // pred_check_branch
              %404 = sbr.rel (0) target = $region60
            $region59: #{tpu_custom_call.1} parent=55 // pred_region
              // Predicated region
              $region79: #{tpu_custom_call.1} parent=59 // pred_check
                _
              $region80: #{tpu_custom_call.1} parent=59 // pred_check_branch
                %456 = sbr.rel (0) target = $region82
              $region81: #{tpu_custom_call.1} parent=59 // pred_region
                %s457 = sshrl.u32 %s395, 1
                // While loop
                $region83: #{tpu_custom_call.1} parent=81 // loop_pre_header
                  _
                $region84: #{tpu_custom_call.1} parent=81 // loop_header
                  %s459 = sphi 0, %s461
                  %p460 = scmp.ge.s32.totalorder %s459, %s457
                  %s464 = sphi 0, %s473
                  %s465 = sphi %s388, %s476
                  %s466 = sphi %s399, %s477
                $region85: #{tpu_custom_call.1} parent=81 // loop_header_branch
                  %463 = sbr.rel (%p460) target = $region89
                $region86: #{tpu_custom_call.1} parent=81 // loop_body
                  %v467 = vld [vmem:[%s465] sm:$0xff]
                  %468 = vst [vmem:[%s466] sm:$0xff] %v467
                  %v469 = vld [vmem:[%s465 + $0x8] sm:$0xff]
                  %470 = vst [vmem:[%s466 + $0x8] sm:$0xff] %v469
                  %s471 = sadd.s32 1, %s464
                  %p472 = scmp.ge.s32.totalorder %s471, %s457
                  %s473 = scalar_select %p472, 0, %s471
                  %s474 = smul.u32 %s473, 16
                  %s475 = smul.u32 %s473, 16
                  %s476 = scalar_lea.vmem %s388, %s474 [#allocation7]
                  %s477 = scalar_lea.vmem %s399, %s475
                $region87: #{tpu_custom_call.1} parent=81 // loop_footer
                  %s461 = sadd.s32 %s459, 1
                $region88: #{tpu_custom_call.1} parent=81 // loop_footer_branch
                  %458 = sbr.rel target = $region84
                $region89: #{tpu_custom_call.1} parent=81 // loop_exit
                  _
                %s478 = sshrl.u32 %s395, 1
                %s479 = sand.u32 %s395, 1
                %s480 = smul.u32 %s478, 2
                %s481 = smul.u32 8, %s480
                %s482 = scalar_lea.vmem %s388, %s481 [#allocation7]
                %s483 = smul.u32 8, %s480
                %s484 = scalar_lea.vmem %s399, %s483
                // While loop
                $region90: #{tpu_custom_call.1} parent=81 // loop_pre_header
                  _
                $region91: #{tpu_custom_call.1} parent=81 // loop_header
                  %s486 = sphi 0, %s488
                  %p487 = scmp.ge.s32.totalorder %s486, %s479
                  %s491 = sphi 0, %s498
                  %s492 = sphi %s482, %s501
                  %s493 = sphi %s484, %s502
                $region92: #{tpu_custom_call.1} parent=81 // loop_header_branch
                  %490 = sbr.rel (%p487) target = $region96
                $region93: #{tpu_custom_call.1} parent=81 // loop_body
                  %v494 = vld [vmem:[%s492] sm:$0xff]
                  %495 = vst [vmem:[%s493] sm:$0xff] %v494
                  %s496 = sadd.s32 1, %s491
                  %p497 = scmp.ge.s32.totalorder %s496, %s479
                  %s498 = scalar_select %p497, 0, %s496
                  %s499 = smul.u32 %s498, 8
                  %s500 = smul.u32 %s498, 8
                  %s501 = scalar_lea.vmem %s482, %s499 [#allocation7]
                  %s502 = scalar_lea.vmem %s484, %s500
                $region94: #{tpu_custom_call.1} parent=81 // loop_footer
                  %s488 = sadd.s32 %s486, 1
                $region95: #{tpu_custom_call.1} parent=81 // loop_footer_branch
                  %485 = sbr.rel target = $region91
                $region96: #{tpu_custom_call.1} parent=81 // loop_exit
                  _
              $region82: #{tpu_custom_call.1} parent=59 // pred_fallthru
                _
              // Predicated region
              $region97: #{tpu_custom_call.1} parent=59 // pred_check
                _
              $region98: #{tpu_custom_call.1} parent=59 // pred_check_branch
                %504 = sbr.rel target = $region100
              $region99: #{tpu_custom_call.1} parent=59 // pred_region
                _
              $region100: #{tpu_custom_call.1} parent=59 // pred_fallthru
                _
            $region60: #{tpu_custom_call.1} parent=55 // pred_fallthru
              _
            // Predicated region
            $region61: #{tpu_custom_call.1} parent=55 // pred_check
              _
            $region62: #{tpu_custom_call.1} parent=55 // pred_check_branch
              %406 = sbr.rel target = $region64
            $region63: #{tpu_custom_call.1} parent=55 // pred_region
              %s408 = ssub.s32 256, 1
              %s409 = sshrl.u32 %s395, 1
              // While loop
              $region65: #{tpu_custom_call.1} parent=63 // loop_pre_header
                _
              $region66: #{tpu_custom_call.1} parent=63 // loop_header
                %s411 = sphi 0, %s413
                %p412 = scmp.ge.s32.totalorder %s411, %s409
                %s416 = sphi 0, %s425
                %s417 = sphi %s388, %s428
                %s418 = sphi %s399, %s429
              $region67: #{tpu_custom_call.1} parent=63 // loop_header_branch
                %415 = sbr.rel (%p412) target = $region71
              $region68: #{tpu_custom_call.1} parent=63 // loop_body
                %v419 = vld [vmem:[%s417] sm:%s408]
                %420 = vst [vmem:[%s418] sm:%s408] %v419
                %v421 = vld [vmem:[%s417 + $0x8] sm:%s408]
                %422 = vst [vmem:[%s418 + $0x8] sm:%s408] %v421
                %s423 = sadd.s32 1, %s416
                %p424 = scmp.ge.s32.totalorder %s423, %s409
                %s425 = scalar_select %p424, 0, %s423
                %s426 = smul.u32 %s425, 16
                %s427 = smul.u32 %s425, 16
                %s428 = scalar_lea.vmem %s388, %s426 [#allocation7]
                %s429 = scalar_lea.vmem %s399, %s427
              $region69: #{tpu_custom_call.1} parent=63 // loop_footer
                %s413 = sadd.s32 %s411, 1
              $region70: #{tpu_custom_call.1} parent=63 // loop_footer_branch
                %410 = sbr.rel target = $region66
              $region71: #{tpu_custom_call.1} parent=63 // loop_exit
                _
              %s430 = sshrl.u32 %s395, 1
              %s431 = sand.u32 %s395, 1
              %s432 = smul.u32 %s430, 2
              %s433 = smul.u32 8, %s432
              %s434 = scalar_lea.vmem %s388, %s433 [#allocation7]
              %s435 = smul.u32 8, %s432
              %s436 = scalar_lea.vmem %s399, %s435
              // While loop
              $region72: #{tpu_custom_call.1} parent=63 // loop_pre_header
                _
              $region73: #{tpu_custom_call.1} parent=63 // loop_header
                %s438 = sphi 0, %s440
                %p439 = scmp.ge.s32.totalorder %s438, %s431
                %s443 = sphi 0, %s450
                %s444 = sphi %s434, %s453
                %s445 = sphi %s436, %s454
              $region74: #{tpu_custom_call.1} parent=63 // loop_header_branch
                %442 = sbr.rel (%p439) target = $region78
              $region75: #{tpu_custom_call.1} parent=63 // loop_body
                %v446 = vld [vmem:[%s444] sm:%s408]
                %447 = vst [vmem:[%s445] sm:%s408] %v446
                %s448 = sadd.s32 1, %s443
                %p449 = scmp.ge.s32.totalorder %s448, %s431
                %s450 = scalar_select %p449, 0, %s448
                %s451 = smul.u32 %s450, 8
                %s452 = smul.u32 %s450, 8
                %s453 = scalar_lea.vmem %s434, %s451 [#allocation7]
                %s454 = scalar_lea.vmem %s436, %s452
              $region76: #{tpu_custom_call.1} parent=63 // loop_footer
                %s440 = sadd.s32 %s438, 1
              $region77: #{tpu_custom_call.1} parent=63 // loop_footer_branch
                %437 = sbr.rel target = $region73
              $region78: #{tpu_custom_call.1} parent=63 // loop_exit
                _
            $region64: #{tpu_custom_call.1} parent=55 // pred_fallthru
              _
          $region56: #{tpu_custom_call.1} parent=51 // pred_fallthru
            _
          %505 = vnop
        $region52: #{tpu_custom_call.1} parent=27 // pred_fallthru
          _
      $region28: #{tpu_custom_call.1} parent=5 // pred_fallthru
        _
      %p506 = scmp.le.s32.totalorder 2, %s11
      // Predicated region
      $region101: #{tpu_custom_call.1} parent=5 // pred_check
        %p507 = pneg %p506
      $region102: #{tpu_custom_call.1} parent=5 // pred_check_branch
        %509 = sbr.rel (%p507) target = $region104
      $region103: #{tpu_custom_call.1} parent=5 // pred_region
        %s510 = ssub.s32 %s11, 2
        // Predicated region
        $region105: #{tpu_custom_call.1} parent=103 // pred_check
          %p511 = pneg %p106
        $region106: #{tpu_custom_call.1} parent=103 // pred_check_branch
          %513 = sbr.rel (%p511) target = $region108
        $region107: #{tpu_custom_call.1} parent=103 // pred_region
          %s514 = sand.u32 %s91, 1
          %s515 = sand.u32 %s91, 1
          %s516 = smul.addr %s515, 16
          %s517 = scalar_lea.vmem [#allocation7], %s516
        $region108: #{tpu_custom_call.1} parent=103 // pred_fallthru
          _
      $region104: #{tpu_custom_call.1} parent=5 // pred_fallthru
        _
    $region6: #{tpu_custom_call.1} parent=1 // loop_footer
      %s15 = sadd.s32 1, %s11
    $region7: #{tpu_custom_call.1} parent=1 // loop_footer_branch
      %10 = sbr.rel target = $region3
    $region8: #{tpu_custom_call.1} parent=1 // loop_exit
      _
    %518 = vsyncpa [#allocation6], 1
    %s519 = scalar_lea.sflag [#allocation6], 1
    %520 = vsyncpa %s519, 1

</llo_original>
